<compile_context>
chip_gen: v6e
topology: v6e:2x2x1
jax: 0.10.0
libtpu: 0.0.40
codegen_flags: <defaults>
</compile_context>

<pallas_src>
import jax
import jax.numpy as jnp
from jax.experimental import pallas as pl
from jax.experimental.pallas import tpu as pltpu


# ----------------------------------------------------------------------------
# Fused kernel: conv(im2col matmul)+ReLU -> GAP(matmul) -> lin1 -> lin2
# ----------------------------------------------------------------------------
def _fused_forward_kernel(patches_ref, wc_ref, bc_ref, pool_ref,
                          w1_ref, b1_ref, w2_ref, b2_ref, o_ref):
    # 1) backbone stand-in conv as one im2col matmul: (M, 9*Cin) @ (9*Cin, Cf)
    conv = jnp.dot(patches_ref[...], wc_ref[...],
                   preferred_element_type=jnp.float32)
    conv = jnp.maximum(conv + bc_ref[...], 0.0)                 # bias + ReLU

    # 2) global average pool == torch.mean(h, dim=(-1,-2)), done as a matmul
    #    with a block-diagonal averaging matrix: (B, M) @ (M, Cf) -> (B, Cf).
    #    Keeps the reduction on the MXU and the conv activations in VMEM.
    pooled = jnp.dot(pool_ref[...], conv.astype(pool_ref.dtype),
                     preferred_element_type=jnp.float32)

    # feat_module_type='none' => identity (x_feat unused)

    # 3) lin1: Linear + BatchNorm1d(eval) folded into (w1_eff, b1_eff) + leaky_relu
    h1 = jnp.dot(pooled.astype(w1_ref.dtype), w1_ref[...],
                 preferred_element_type=jnp.float32) + b1_ref[...]
    h1 = jnp.where(h1 >= 0.0, h1, 0.01 * h1)     # F.leaky_relu default slope

    # 4) lin2: Linear + BatchNorm1d(eval) folded, no activation
    out = jnp.dot(h1.astype(w2_ref.dtype), w2_ref[...],
                  preferred_element_type=jnp.float32) + b2_ref[...]
    o_ref[...] = out.astype(o_ref.dtype)


# ----------------------------------------------------------------------------
# Wrapper: NCHW boundary, im2col build, BN folding, single pallas_call.
# ----------------------------------------------------------------------------
def pretrained_cnn_multi_forward(params, x_nchw, x_feat=None, eps=1e-5):
    """x_nchw: (bs, ch, h, w) -> (bs, out_dim), mirroring the PyTorch forward."""
    B, Cin, H, W = x_nchw.shape
    # conv0 is None for the default se_resnext-style config => h = x
    x = jnp.transpose(x_nchw, (0, 2, 3, 1)).astype(jnp.float32)   # NCHW -> NHWC

    # im2col for the 3x3 / stride-1 / pad-1 stand-in backbone conv:
    # (B, H, W, 9*Cin) -> (B*H*W, 9*Cin), batch folded into the matmul M dim.
    xp = jnp.pad(x, ((0, 0), (1, 1), (1, 1), (0, 0)))
    cols = [xp[:, dy:dy + H, dx:dx + W, :] for dy in range(3) for dx in range(3)]
    patches = jnp.concatenate(cols, axis=-1).reshape(B * H * W, 9 * Cin)

    feat_w = params["feat_w"]                      # (3, 3, Cin, Cf)
    Cf = feat_w.shape[-1]
    wc = feat_w.reshape(9 * Cin, Cf)               # tap-major, matches patches
    bc = params["feat_b"].reshape(1, Cf)

    # Global-average-pool matrix: row b averages rows [b*H*W, (b+1)*H*W).
    pool = jnp.repeat(jnp.eye(B, dtype=jnp.float32), H * W, axis=1) / float(H * W)

    # Fold eval-mode BatchNorm1d into the linear weights/biases (glue math).
    def fold_bn(w, b, gamma, beta, mean, var):
        scale = gamma / jnp.sqrt(var + eps)
        return w * scale[None, :], (b - mean) * scale + beta

    w1_eff, b1_eff = fold_bn(params["w1"], params["b1"], params["bn1_gamma"],
                             params["bn1_beta"], params["bn1_mean"], params["bn1_var"])
    w2_eff, b2_eff = fold_bn(params["w2"], params["b2"], params["bn2_gamma"],
                             params["bn2_beta"], params["bn2_mean"], params["bn2_var"])
    hdim = w1_eff.shape[1]
    out_dim = w2_eff.shape[1]

    bf = jnp.bfloat16
    f32 = jnp.float32

    def full(shape):
        return pl.BlockSpec(shape, lambda i: (0,) * len(shape))

    return pl.pallas_call(
        _fused_forward_kernel,
        out_shape=jax.ShapeDtypeStruct((B, out_dim), f32),
        grid=(1,),
        in_specs=[
            full((B * H * W, 9 * Cin)),   # im2col patches
            full((9 * Cin, Cf)),          # conv weight
            full((1, Cf)),                # conv bias
            full((B, B * H * W)),         # pooling matrix
            full((Cf, hdim)),             # lin1 weight (BN folded)
            full((1, hdim)),              # lin1 bias   (BN folded)
            full((hdim, out_dim)),        # lin2 weight (BN folded)
            full((1, out_dim)),           # lin2 bias   (BN folded)
        ],
        out_specs=full((B, out_dim)),
        compiler_params=pltpu.CompilerParams(dimension_semantics=("arbitrary",)),
    )(patches.astype(bf), wc.astype(bf), bc.astype(f32), pool.astype(bf),
      w1_eff.astype(bf), b1_eff.reshape(1, hdim).astype(f32),
      w2_eff.astype(bf), b2_eff.reshape(1, out_dim).astype(f32))


# ----------------------------------------------------------------------------
# Parameter init
# ----------------------------------------------------------------------------
def init_params(key, in_channels, feat_ch, hdim, out_dim):
    ks = jax.random.split(key, 8)
    return {
        # stand-in for base_model.features (first conv replaced to in_channels)
        # TODO(synk): full SE-ResNeXt101 backbone is an external pretrained
        # model and is not reproducible here; a single conv+ReLU stage stands in.
        "feat_w": 0.1 * jax.random.normal(ks[0], (3, 3, in_channels, feat_ch), jnp.float32),
        "feat_b": 0.1 * jax.random.normal(ks[1], (feat_ch,), jnp.float32),
        # lin1: Linear(feat_ch, hdim) + BN + leaky_relu
        "w1": 0.1 * jax.random.normal(ks[2], (feat_ch, hdim), jnp.float32),
        "b1": 0.1 * jax.random.normal(ks[3], (hdim,), jnp.float32),
        "bn1_gamma": 1.0 + 0.1 * jax.random.normal(ks[4], (hdim,), jnp.float32),
        "bn1_beta": 0.1 * jax.random.normal(ks[5], (hdim,), jnp.float32),
        "bn1_mean": jnp.zeros((hdim,), jnp.float32),
        "bn1_var": jnp.ones((hdim,), jnp.float32),
        # lin2: Linear(hdim, out_dim) + BN, no activation
        "w2": 0.1 * jax.random.normal(ks[6], (hdim, out_dim), jnp.float32),
        "b2": 0.1 * jax.random.normal(ks[7], (out_dim,), jnp.float32),
        "bn2_gamma": jnp.ones((out_dim,), jnp.float32),
        "bn2_beta": jnp.zeros((out_dim,), jnp.float32),
        "bn2_mean": jnp.zeros((out_dim,), jnp.float32),
        "bn2_var": jnp.ones((out_dim,), jnp.float32),
    }


if __name__ == "__main__":
    # Small shapes consistent with the module's forward.
    B, Cin, H, W = 2, 4, 16, 16
    feat_ch = 32          # stand-in for base_model.last_linear.in_features
    hdim = 32
    num_modes, future_len = 3, 5
    num_preds = future_len * 2
    out_dim = num_modes * num_preds + num_modes   # 33 (trajectories + mode logits)

    key = jax.random.PRNGKey(0)
    k_x, k_p = jax.random.split(key)
    x = jax.random.normal(k_x, (B, Cin, H, W), jnp.float32)   # NCHW like PyTorch
    params = init_params(k_p, Cin, feat_ch, hdim, out_dim)

    out = pretrained_cnn_multi_forward(params, x)
    out = jax.block_until_ready(out)
    assert out.shape == (B, out_dim), out.shape
    print("KERNEL_OK")
</pallas_src>

<mosaic_0001>
module attributes {stable_mosaic.version = 11 : i64} {
  func.func @_fused_forward_kernel(%arg0: i32, %arg1: memref<512x36xbf16, #tpu.memory_space<vmem>>, %arg2: memref<36x32xbf16, #tpu.memory_space<vmem>>, %arg3: memref<1x32xf32, #tpu.memory_space<vmem>>, %arg4: memref<2x512xbf16, #tpu.memory_space<vmem>>, %arg5: memref<32x32xbf16, #tpu.memory_space<vmem>>, %arg6: memref<1x32xf32, #tpu.memory_space<vmem>>, %arg7: memref<32x33xbf16, #tpu.memory_space<vmem>>, %arg8: memref<1x33xf32, #tpu.memory_space<vmem>>, %arg9: memref<2x33xf32, #tpu.memory_space<vmem>>) attributes {dimension_semantics = [#tpu.dimension_semantics<arbitrary>], iteration_bounds = array<i64: 1>, scalar_prefetch = 0 : i64, scratch_operands = 0 : i64, tpu.core_type = #tpu.core_type<tc>, window_params = [{pipeline_mode = #tpu.pipeline_mode<synchronous>, transform_indices = @transform_0, window_bounds = array<i64: 512, 36>}, {pipeline_mode = #tpu.pipeline_mode<synchronous>, transform_indices = @transform_1, window_bounds = array<i64: 36, 32>}, {pipeline_mode = #tpu.pipeline_mode<synchronous>, transform_indices = @transform_2, window_bounds = array<i64: 1, 32>}, {pipeline_mode = #tpu.pipeline_mode<synchronous>, transform_indices = @transform_3, window_bounds = array<i64: 2, 512>}, {pipeline_mode = #tpu.pipeline_mode<synchronous>, transform_indices = @transform_4, window_bounds = array<i64: 32, 32>}, {pipeline_mode = #tpu.pipeline_mode<synchronous>, transform_indices = @transform_5, window_bounds = array<i64: 1, 32>}, {pipeline_mode = #tpu.pipeline_mode<synchronous>, transform_indices = @transform_6, window_bounds = array<i64: 32, 33>}, {pipeline_mode = #tpu.pipeline_mode<synchronous>, transform_indices = @transform_7, window_bounds = array<i64: 1, 33>}, {pipeline_mode = #tpu.pipeline_mode<synchronous>, transform_indices = @transform_8, window_bounds = array<i64: 2, 33>}]} {
    %c0 = arith.constant 0 : index
    %c0_0 = arith.constant 0 : index
    %0 = vector.load %arg1[%c0, %c0_0] : memref<512x36xbf16, #tpu.memory_space<vmem>>, vector<512x36xbf16>
    %c0_1 = arith.constant 0 : index
    %c0_2 = arith.constant 0 : index
    %1 = vector.load %arg2[%c0_1, %c0_2] : memref<36x32xbf16, #tpu.memory_space<vmem>>, vector<36x32xbf16>
    %cst = arith.constant dense<0.000000e+00> : vector<512x32xf32>
    %2 = tpu.matmul %0, %1, %cst {dimension_numbers = #tpu.dot_dimension_numbers<[1], [0], [0], [1], [0, 0, 1, 1], [], []>} : vector<512x36xbf16>, vector<36x32xbf16>, vector<512x32xf32> -> vector<512x32xf32>
    %c0_3 = arith.constant 0 : index
    %c0_4 = arith.constant 0 : index
    %3 = vector.load %arg3[%c0_3, %c0_4] : memref<1x32xf32, #tpu.memory_space<vmem>>, vector<1x32xf32>
    %4 = vector.broadcast %3 : vector<1x32xf32> to vector<512x32xf32>
    %5 = arith.addf %2, %4 : vector<512x32xf32>
    %cst_5 = arith.constant 0.000000e+00 : f32
    %6 = vector.broadcast %cst_5 : f32 to vector<512x32xf32>
    %7 = arith.maximumf %5, %6 : vector<512x32xf32>
    %c0_6 = arith.constant 0 : index
    %c0_7 = arith.constant 0 : index
    %8 = vector.load %arg4[%c0_6, %c0_7] : memref<2x512xbf16, #tpu.memory_space<vmem>>, vector<2x512xbf16>
    %9 = arith.truncf %7 : vector<512x32xf32> to vector<512x32xbf16>
    %cst_8 = arith.constant dense<0.000000e+00> : vector<2x32xf32>
    %10 = tpu.matmul %8, %9, %cst_8 {dimension_numbers = #tpu.dot_dimension_numbers<[1], [0], [0], [1], [0, 0, 1, 1], [], []>} : vector<2x512xbf16>, vector<512x32xbf16>, vector<2x32xf32> -> vector<2x32xf32>
    %11 = arith.truncf %10 : vector<2x32xf32> to vector<2x32xbf16>
    %c0_9 = arith.constant 0 : index
    %c0_10 = arith.constant 0 : index
    %12 = vector.load %arg5[%c0_9, %c0_10] : memref<32x32xbf16, #tpu.memory_space<vmem>>, vector<32x32xbf16>
    %cst_11 = arith.constant dense<0.000000e+00> : vector<2x32xf32>
    %13 = tpu.matmul %11, %12, %cst_11 {dimension_numbers = #tpu.dot_dimension_numbers<[1], [0], [0], [1], [0, 0, 1, 1], [], []>} : vector<2x32xbf16>, vector<32x32xbf16>, vector<2x32xf32> -> vector<2x32xf32>
    %c0_12 = arith.constant 0 : index
    %c0_13 = arith.constant 0 : index
    %14 = vector.load %arg6[%c0_12, %c0_13] : memref<1x32xf32, #tpu.memory_space<vmem>>, vector<1x32xf32>
    %15 = vector.broadcast %14 : vector<1x32xf32> to vector<2x32xf32>
    %16 = arith.addf %13, %15 : vector<2x32xf32>
    %cst_14 = arith.constant 0.000000e+00 : f32
    %17 = vector.broadcast %cst_14 : f32 to vector<2x32xf32>
    %18 = arith.cmpf oge, %16, %17 : vector<2x32xf32>
    %cst_15 = arith.constant 0.00999999977 : f32
    %19 = vector.broadcast %cst_15 : f32 to vector<2x32xf32>
    %20 = arith.mulf %19, %16 : vector<2x32xf32>
    %21 = arith.select %18, %16, %20 : vector<2x32xi1>, vector<2x32xf32>
    %22 = arith.truncf %21 : vector<2x32xf32> to vector<2x32xbf16>
    %c0_16 = arith.constant 0 : index
    %c0_17 = arith.constant 0 : index
    %23 = vector.load %arg7[%c0_16, %c0_17] : memref<32x33xbf16, #tpu.memory_space<vmem>>, vector<32x33xbf16>
    %cst_18 = arith.constant dense<0.000000e+00> : vector<2x33xf32>
    %24 = tpu.matmul %22, %23, %cst_18 {dimension_numbers = #tpu.dot_dimension_numbers<[1], [0], [0], [1], [0, 0, 1, 1], [], []>} : vector<2x32xbf16>, vector<32x33xbf16>, vector<2x33xf32> -> vector<2x33xf32>
    %c0_19 = arith.constant 0 : index
    %c0_20 = arith.constant 0 : index
    %25 = vector.load %arg8[%c0_19, %c0_20] : memref<1x33xf32, #tpu.memory_space<vmem>>, vector<1x33xf32>
    %26 = vector.broadcast %25 : vector<1x33xf32> to vector<2x33xf32>
    %27 = arith.addf %24, %26 : vector<2x33xf32>
    %c0_21 = arith.constant 0 : index
    %c0_22 = arith.constant 0 : index
    %28 = vector.load %arg9[%c0_21, %c0_22] : memref<2x33xf32, #tpu.memory_space<vmem>>, vector<2x33xf32>
    tpu.vector_store %arg9[%c0_21, %c0_22], %27 {strides = array<i32>} : memref<2x33xf32, #tpu.memory_space<vmem>>, vector<2x33xf32>,
    return
  }
  func.func @transform_0(%arg0: i32) -> (i32, i32) {
    %c0_i32 = arith.constant 0 : i32
    %c0_i32_0 = arith.constant 0 : i32
    %c0_i32_1 = arith.constant 0 : i32
    return %c0_i32, %c0_i32_0 : i32, i32
  }
  func.func @transform_1(%arg0: i32) -> (i32, i32) {
    %c0_i32 = arith.constant 0 : i32
    %c0_i32_0 = arith.constant 0 : i32
    %c0_i32_1 = arith.constant 0 : i32
    return %c0_i32, %c0_i32_0 : i32, i32
  }
  func.func @transform_2(%arg0: i32) -> (i32, i32) {
    %c0_i32 = arith.constant 0 : i32
    %c0_i32_0 = arith.constant 0 : i32
    %c0_i32_1 = arith.constant 0 : i32
    return %c0_i32, %c0_i32_0 : i32, i32
  }
  func.func @transform_3(%arg0: i32) -> (i32, i32) {
    %c0_i32 = arith.constant 0 : i32
    %c0_i32_0 = arith.constant 0 : i32
    %c0_i32_1 = arith.constant 0 : i32
    return %c0_i32, %c0_i32_0 : i32, i32
  }
  func.func @transform_4(%arg0: i32) -> (i32, i32) {
    %c0_i32 = arith.constant 0 : i32
    %c0_i32_0 = arith.constant 0 : i32
    %c0_i32_1 = arith.constant 0 : i32
    return %c0_i32, %c0_i32_0 : i32, i32
  }
  func.func @transform_5(%arg0: i32) -> (i32, i32) {
    %c0_i32 = arith.constant 0 : i32
    %c0_i32_0 = arith.constant 0 : i32
    %c0_i32_1 = arith.constant 0 : i32
    return %c0_i32, %c0_i32_0 : i32, i32
  }
  func.func @transform_6(%arg0: i32) -> (i32, i32) {
    %c0_i32 = arith.constant 0 : i32
    %c0_i32_0 = arith.constant 0 : i32
    %c0_i32_1 = arith.constant 0 : i32
    return %c0_i32, %c0_i32_0 : i32, i32
  }
  func.func @transform_7(%arg0: i32) -> (i32, i32) {
    %c0_i32 = arith.constant 0 : i32
    %c0_i32_0 = arith.constant 0 : i32
    %c0_i32_1 = arith.constant 0 : i32
    return %c0_i32, %c0_i32_0 : i32, i32
  }
  func.func @transform_8(%arg0: i32) -> (i32, i32) {
    %c0_i32 = arith.constant 0 : i32
    %c0_i32_0 = arith.constant 0 : i32
    %c0_i32_1 = arith.constant 0 : i32
    return %c0_i32, %c0_i32_0 : i32, i32
  }
}

</mosaic_0001>

<llo_original>
// kernel: tpu_custom_call.1
$region0: #{tpu_custom_call.1}
  #allocation0 [shape = 'u32[]', space=smem, size = 0x4, offset = 0x4, fixed_abs, tag = 'smem constant byte address 0x4 - core index']
  #allocation1 [shape = 'u32[144,128]{1,0:T(1,128)}', space=vmem, size = 0x12000, scoped, tag = 'internal scratch']
  %s0 = inlined_call_operand.vmem [shape: bf16[512,36], index: 0, kind: input, shape index: {}]
  %s1 = inlined_call_operand.vmem [shape: bf16[36,32], index: 1, kind: input, shape index: {}]
  %s2 = inlined_call_operand.vmem [shape: f32[1,32], index: 2, kind: input, shape index: {}]
  %s3 = inlined_call_operand.vmem [shape: bf16[2,512], index: 3, kind: input, shape index: {}]
  %s4 = inlined_call_operand.vmem [shape: bf16[32,32], index: 4, kind: input, shape index: {}]
  %s5 = inlined_call_operand.vmem [shape: f32[1,32], index: 5, kind: input, shape index: {}]
  %s6 = inlined_call_operand.vmem [shape: bf16[32,33], index: 6, kind: input, shape index: {}]
  %s7 = inlined_call_operand.vmem [shape: f32[1,33], index: 7, kind: input, shape index: {}]
  %s8 = inlined_call_operand.hbm [shape: f32[2,33], index: 8, kind: output, shape index: {}]
  %s9 = sld [smem:[#allocation0]]
  $region42: #{tpu_custom_call.1} parent=0
    _
  %s11 = ssub.s32 1, %s9
  %s12 = scalar_select 0, %s11, %s9
  $region1: #{tpu_custom_call.1} parent=0
    #allocation2 [shape = 'u8[1024]{0}', space=vmem, size = 0x400, scoped, tag = 'output window, operand 0, single buffered']
    #allocation3 [shape = 's32[1]{0}', space=sflag, size = 0x4, scoped, tag = 'scoped memory for tpu_custom_call.1']
    %13 = vsyncpa [#allocation3], 0
    // Predicated region
    $region2: #{tpu_custom_call.1} parent=1 // pred_check
      _
    $region3: #{tpu_custom_call.1} parent=1 // pred_check_branch
      %15 = sbr.rel (0) target = $region5
    $region4: #{tpu_custom_call.1} parent=1 // pred_region
      _
    $region5: #{tpu_custom_call.1} parent=1 // pred_fallthru
      _
    // Predicated region
    $region6: #{tpu_custom_call.1} parent=1 // pred_check
      _
    $region7: #{tpu_custom_call.1} parent=1 // pred_check_branch
      %17 = sbr.rel (0) target = $region9
    $region8: #{tpu_custom_call.1} parent=1 // pred_region
      _
    $region9: #{tpu_custom_call.1} parent=1 // pred_fallthru
      _
    // Predicated region
    $region10: #{tpu_custom_call.1} parent=1 // pred_check
      _
    $region11: #{tpu_custom_call.1} parent=1 // pred_check_branch
      %19 = sbr.rel (0) target = $region13
    $region12: #{tpu_custom_call.1} parent=1 // pred_region
      _
    $region13: #{tpu_custom_call.1} parent=1 // pred_fallthru
      _
    // Predicated region
    $region14: #{tpu_custom_call.1} parent=1 // pred_check
      _
    $region15: #{tpu_custom_call.1} parent=1 // pred_check_branch
      %21 = sbr.rel (0) target = $region17
    $region16: #{tpu_custom_call.1} parent=1 // pred_region
      _
    $region17: #{tpu_custom_call.1} parent=1 // pred_fallthru
      _
    // Predicated region
    $region18: #{tpu_custom_call.1} parent=1 // pred_check
      _
    $region19: #{tpu_custom_call.1} parent=1 // pred_check_branch
      %23 = sbr.rel (0) target = $region21
    $region20: #{tpu_custom_call.1} parent=1 // pred_region
      _
    $region21: #{tpu_custom_call.1} parent=1 // pred_fallthru
      _
    // Predicated region
    $region22: #{tpu_custom_call.1} parent=1 // pred_check
      _
    $region23: #{tpu_custom_call.1} parent=1 // pred_check_branch
      %25 = sbr.rel (0) target = $region25
    $region24: #{tpu_custom_call.1} parent=1 // pred_region
      _
    $region25: #{tpu_custom_call.1} parent=1 // pred_fallthru
      _
    // Predicated region
    $region26: #{tpu_custom_call.1} parent=1 // pred_check
      _
    $region27: #{tpu_custom_call.1} parent=1 // pred_check_branch
      %27 = sbr.rel (0) target = $region29
    $region28: #{tpu_custom_call.1} parent=1 // pred_region
      _
    $region29: #{tpu_custom_call.1} parent=1 // pred_fallthru
      _
    // Predicated region
    $region30: #{tpu_custom_call.1} parent=1 // pred_check
      _
    $region31: #{tpu_custom_call.1} parent=1 // pred_check_branch
      %29 = sbr.rel (0) target = $region33
    $region32: #{tpu_custom_call.1} parent=1 // pred_region
      _
    $region33: #{tpu_custom_call.1} parent=1 // pred_fallthru
      _
    %v31 = vld [vmem:[%s0] sm:$0xf]
    %v32 = vld [vmem:[%s0 + $0x4] sm:$0xf]
    %v33 = vld [vmem:[%s0 + $0x8] sm:$0xf]
    %v34 = vld [vmem:[%s0 + $0xc] sm:$0xf]
    %v35 = vld [vmem:[%s0 + $0x10] sm:$0xf]
    %v36 = vld [vmem:[%s0 + $0x14] sm:$0xf]
    %v37 = vld [vmem:[%s0 + $0x18] sm:$0xf]
    %v38 = vld [vmem:[%s0 + $0x1c] sm:$0xf]
    %v39 = vld [vmem:[%s0 + $0x20] sm:$0xf]
    %v40 = vld [vmem:[%s0 + $0x24] sm:$0xf]
    %v41 = vld [vmem:[%s0 + $0x28] sm:$0xf]
    %v42 = vld [vmem:[%s0 + $0x2c] sm:$0xf]
    %v43 = vld [vmem:[%s0 + $0x30] sm:$0xf]
    %v44 = vld [vmem:[%s0 + $0x34] sm:$0xf]
    %v45 = vld [vmem:[%s0 + $0x38] sm:$0xf]
    %v46 = vld [vmem:[%s0 + $0x3c] sm:$0xf]
    %v47 = vld [vmem:[%s0 + $0x40] sm:$0xf]
    %v48 = vld [vmem:[%s0 + $0x44] sm:$0xf]
    %v49 = vld [vmem:[%s0 + $0x48] sm:$0xf]
    %v50 = vld [vmem:[%s0 + $0x4c] sm:$0xf]
    %v51 = vld [vmem:[%s0 + $0x50] sm:$0xf]
    %v52 = vld [vmem:[%s0 + $0x54] sm:$0xf]
    %v53 = vld [vmem:[%s0 + $0x58] sm:$0xf]
    %v54 = vld [vmem:[%s0 + $0x5c] sm:$0xf]
    %v55 = vld [vmem:[%s0 + $0x60] sm:$0xf]
    %v56 = vld [vmem:[%s0 + $0x64] sm:$0xf]
    %v57 = vld [vmem:[%s0 + $0x68] sm:$0xf]
    %v58 = vld [vmem:[%s0 + $0x6c] sm:$0xf]
    %v59 = vld [vmem:[%s0 + $0x70] sm:$0xf]
    %v60 = vld [vmem:[%s0 + $0x74] sm:$0xf]
    %v61 = vld [vmem:[%s0 + $0x78] sm:$0xf]
    %v62 = vld [vmem:[%s0 + $0x7c] sm:$0xf]
    %v63 = vld [vmem:[%s0 + $0x80] sm:$0xf]
    %v64 = vld [vmem:[%s0 + $0x84] sm:$0xf]
    %v65 = vld [vmem:[%s0 + $0x88] sm:$0xf]
    %v66 = vld [vmem:[%s0 + $0x8c] sm:$0xf]
    %v67 = vld [vmem:[%s0 + $0x90] sm:$0xf]
    %v68 = vld [vmem:[%s0 + $0x94] sm:$0xf]
    %v69 = vld [vmem:[%s0 + $0x98] sm:$0xf]
    %v70 = vld [vmem:[%s0 + $0x9c] sm:$0xf]
    %v71 = vld [vmem:[%s0 + $0xa0] sm:$0xf]
    %v72 = vld [vmem:[%s0 + $0xa4] sm:$0xf]
    %v73 = vld [vmem:[%s0 + $0xa8] sm:$0xf]
    %v74 = vld [vmem:[%s0 + $0xac] sm:$0xf]
    %v75 = vld [vmem:[%s0 + $0xb0] sm:$0xf]
    %v76 = vld [vmem:[%s0 + $0xb4] sm:$0xf]
    %v77 = vld [vmem:[%s0 + $0xb8] sm:$0xf]
    %v78 = vld [vmem:[%s0 + $0xbc] sm:$0xf]
    %v79 = vld [vmem:[%s0 + $0xc0] sm:$0xf]
    %v80 = vld [vmem:[%s0 + $0xc4] sm:$0xf]
    %v81 = vld [vmem:[%s0 + $0xc8] sm:$0xf]
    %v82 = vld [vmem:[%s0 + $0xcc] sm:$0xf]
    %v83 = vld [vmem:[%s0 + $0xd0] sm:$0xf]
    %v84 = vld [vmem:[%s0 + $0xd4] sm:$0xf]
    %v85 = vld [vmem:[%s0 + $0xd8] sm:$0xf]
    %v86 = vld [vmem:[%s0 + $0xdc] sm:$0xf]
    %v87 = vld [vmem:[%s0 + $0xe0] sm:$0xf]
    %v88 = vld [vmem:[%s0 + $0xe4] sm:$0xf]
    %v89 = vld [vmem:[%s0 + $0xe8] sm:$0xf]
    %v90 = vld [vmem:[%s0 + $0xec] sm:$0xf]
    %v91 = vld [vmem:[%s0 + $0xf0] sm:$0xf]
    %v92 = vld [vmem:[%s0 + $0xf4] sm:$0xf]
    %v93 = vld [vmem:[%s0 + $0xf8] sm:$0xf]
    %v94 = vld [vmem:[%s0 + $0xfc] sm:$0xf]
    %v95 = vld [vmem:[%s1] sm:$0xf]
    %v96 = vld [vmem:[%s1 + $0x4] sm:$0xf]
    %v97 = vld [vmem:[%s1 + $0x8] sm:$0xf]
    %v98 = vld [vmem:[%s1 + $0xc] sm:$0xf]
    %v99 = vld [vmem:[%s1 + $0x10] sm:$0x3]
    %v100 = vld [vmem:[%s2] sm:$0x1]
    %v102 = vlaneseq
    %v103 = vshrl.u32 %v102, 7
    %v104 = vsub.s32 0, %v103
    %v105 = vrot.slane %v100, %v104
    %v171 = vunpack.c.l.b16 %v31
    %v172 = vunpack.c.l.b16 %v32
    %v173 = vunpack.c.l.b16 %v33
    %v174 = vunpack.c.l.b16 %v34
    %v175 = vunpack.c.l.b16 %v35
    %v176 = vunpack.c.l.b16 %v36
    %v177 = vunpack.c.l.b16 %v37
    %v178 = vunpack.c.l.b16 %v38
    %v179 = vunpack.c.l.b16 %v39
    %v180 = vunpack.c.l.b16 %v40
    %v181 = vunpack.c.l.b16 %v41
    %v182 = vunpack.c.l.b16 %v42
    %v183 = vunpack.c.l.b16 %v43
    %v184 = vunpack.c.l.b16 %v44
    %v185 = vunpack.c.l.b16 %v45
    %v186 = vunpack.c.l.b16 %v46
    %v187 = vunpack.c.l.b16 %v47
    %v188 = vunpack.c.l.b16 %v48
    %v189 = vunpack.c.l.b16 %v49
    %v190 = vunpack.c.l.b16 %v50
    %v191 = vunpack.c.l.b16 %v51
    %v192 = vunpack.c.l.b16 %v52
    %v193 = vunpack.c.l.b16 %v53
    %v194 = vunpack.c.l.b16 %v54
    %v195 = vunpack.c.l.b16 %v55
    %v196 = vunpack.c.l.b16 %v56
    %v197 = vunpack.c.l.b16 %v57
    %v198 = vunpack.c.l.b16 %v58
    %v199 = vunpack.c.l.b16 %v59
    %v200 = vunpack.c.l.b16 %v60
    %v201 = vunpack.c.l.b16 %v61
    %v202 = vunpack.c.l.b16 %v62
    %v203 = vunpack.c.l.b16 %v63
    %v204 = vunpack.c.l.b16 %v64
    %v205 = vunpack.c.l.b16 %v65
    %v206 = vunpack.c.l.b16 %v66
    %v207 = vunpack.c.l.b16 %v67
    %v208 = vunpack.c.l.b16 %v68
    %v209 = vunpack.c.l.b16 %v69
    %v210 = vunpack.c.l.b16 %v70
    %v211 = vunpack.c.l.b16 %v71
    %v212 = vunpack.c.l.b16 %v72
    %v213 = vunpack.c.l.b16 %v73
    %v214 = vunpack.c.l.b16 %v74
    %v215 = vunpack.c.l.b16 %v75
    %v216 = vunpack.c.l.b16 %v76
    %v217 = vunpack.c.l.b16 %v77
    %v218 = vunpack.c.l.b16 %v78
    %v219 = vunpack.c.l.b16 %v79
    %v220 = vunpack.c.l.b16 %v80
    %v221 = vunpack.c.l.b16 %v81
    %v222 = vunpack.c.l.b16 %v82
    %v223 = vunpack.c.l.b16 %v83
    %v224 = vunpack.c.l.b16 %v84
    %v225 = vunpack.c.l.b16 %v85
    %v226 = vunpack.c.l.b16 %v86
    %v227 = vunpack.c.l.b16 %v87
    %v228 = vunpack.c.l.b16 %v88
    %v229 = vunpack.c.l.b16 %v89
    %v230 = vunpack.c.l.b16 %v90
    %v231 = vunpack.c.l.b16 %v91
    %v232 = vunpack.c.l.b16 %v92
    %v233 = vunpack.c.l.b16 %v93
    %v234 = vunpack.c.l.b16 %v94
    %v235 = vpack.c.b16 %v172, %v171
    %v236 = vpack.c.b16 %v174, %v173
    %v237 = vpack.c.b16 %v176, %v175
    %v238 = vpack.c.b16 %v178, %v177
    %v239 = vpack.c.b16 %v180, %v179
    %v240 = vpack.c.b16 %v182, %v181
    %v241 = vpack.c.b16 %v184, %v183
    %v242 = vpack.c.b16 %v186, %v185
    %v243 = vpack.c.b16 %v188, %v187
    %v244 = vpack.c.b16 %v190, %v189
    %v245 = vpack.c.b16 %v192, %v191
    %v246 = vpack.c.b16 %v194, %v193
    %v247 = vpack.c.b16 %v196, %v195
    %v248 = vpack.c.b16 %v198, %v197
    %v249 = vpack.c.b16 %v200, %v199
    %v250 = vpack.c.b16 %v202, %v201
    %v251 = vpack.c.b16 %v204, %v203
    %v252 = vpack.c.b16 %v206, %v205
    %v253 = vpack.c.b16 %v208, %v207
    %v254 = vpack.c.b16 %v210, %v209
    %v255 = vpack.c.b16 %v212, %v211
    %v256 = vpack.c.b16 %v214, %v213
    %v257 = vpack.c.b16 %v216, %v215
    %v258 = vpack.c.b16 %v218, %v217
    %v259 = vpack.c.b16 %v220, %v219
    %v260 = vpack.c.b16 %v222, %v221
    %v261 = vpack.c.b16 %v224, %v223
    %v262 = vpack.c.b16 %v226, %v225
    %v263 = vpack.c.b16 %v228, %v227
    %v264 = vpack.c.b16 %v230, %v229
    %v265 = vpack.c.b16 %v232, %v231
    %v266 = vpack.c.b16 %v234, %v233
    %v272 = vunpack.c.l.b16 %v95
    %v273 = vunpack.c.l.b16 %v96
    %v274 = vunpack.c.l.b16 %v97
    %v275 = vunpack.c.l.b16 %v98
    %v276 = vunpack.c.l.b16 %v99
    %v277 = vpack.c.b16 %v273, %v272
    %v278 = vpack.c.b16 %v275, %v274
    %v279 = vpack.c.b16 %v276, %v276
    %vm282 = vcmask 293888
    %v284 = vsel %vm282, %v235, 0
    %v287 = vsel %vm282, %v236, 0
    %v290 = vsel %vm282, %v237, 0
    %v293 = vsel %vm282, %v238, 0
    %v296 = vsel %vm282, %v239, 0
    %v299 = vsel %vm282, %v240, 0
    %v302 = vsel %vm282, %v241, 0
    %v305 = vsel %vm282, %v242, 0
    %v308 = vsel %vm282, %v243, 0
    %v311 = vsel %vm282, %v244, 0
    %v314 = vsel %vm282, %v245, 0
    %v317 = vsel %vm282, %v246, 0
    %v320 = vsel %vm282, %v247, 0
    %v323 = vsel %vm282, %v248, 0
    %v326 = vsel %vm282, %v249, 0
    %v329 = vsel %vm282, %v250, 0
    %v332 = vsel %vm282, %v251, 0
    %v335 = vsel %vm282, %v252, 0
    %v338 = vsel %vm282, %v253, 0
    %v341 = vsel %vm282, %v254, 0
    %v344 = vsel %vm282, %v255, 0
    %v347 = vsel %vm282, %v256, 0
    %v350 = vsel %vm282, %v257, 0
    %v353 = vsel %vm282, %v258, 0
    %v356 = vsel %vm282, %v259, 0
    %v359 = vsel %vm282, %v260, 0
    %v362 = vsel %vm282, %v261, 0
    %v365 = vsel %vm282, %v262, 0
    %v368 = vsel %vm282, %v263, 0
    %v371 = vsel %vm282, %v264, 0
    %v374 = vsel %vm282, %v265, 0
    %v377 = vsel %vm282, %v266, 0
    %vm379 = vcmask 1041408
    %v381 = vsel %vm379, %v279, 0
    %383 = vmatprep.subr.bf16.mxu0 0
    %384 = vmatpush1.bf16.msra.mxu0 0
    %385 = vmatprep.subr.bf16.mxu0 0
    %386 = vmatpush1.bf16.msra.mxu0 0
    %387 = vmatprep.subr.bf16.mxu0 0
    %388 = vmatpush1.bf16.msra.mxu0 0
    %389 = vmatprep.subr.bf16.mxu0 0
    %390 = vmatpush1.bf16.msra.mxu0 0
    %391 = vmatprep.subr.bf16.mxu0 0
    %392 = vmatpush1.bf16.msra.mxu0 0
    %393 = vmatprep.subr.bf16.mxu0 0
    %394 = vmatpush1.bf16.msra.mxu0 %v381
    %395 = vmatprep.subr.bf16.mxu0 0
    %396 = vmatpush1.bf16.msra.mxu0 %v278
    %397 = vmatprep.subr.bf16.mxu0 0
    %398 = vmatpush1.bf16.msra.mxu0 %v277
    %399 = vmatprep.subr.bf16.mxu0 0
    %400 = vmatpush2.bf16.msra.mxu0 0
    %401 = vmatprep.subr.bf16.mxu0 0
    %402 = vmatpush2.bf16.msra.mxu0 0
    %403 = vmatprep.subr.bf16.mxu0 0
    %404 = vmatpush2.bf16.msra.mxu0 0
    %405 = vmatprep.subr.bf16.mxu0 0
    %406 = vmatpush2.bf16.msra.mxu0 0
    %407 = vmatprep.subr.bf16.mxu0 0
    %408 = vmatpush2.bf16.msra.mxu0 0
    %409 = vmatprep.subr.bf16.mxu0 0
    %410 = vmatpush2.bf16.msra.mxu0 0
    %411 = vmatprep.subr.bf16.mxu0 0
    %412 = vmatpush2.bf16.msra.mxu0 0
    %413 = vmatprep.subr.bf16.mxu0 0
    %414 = vmatpush2.bf16.msra.mxu0 0
    %415 = vmatprep.mubr.bf16.mxu0 0
    %416 = vmatmul.mubr.bf16.gmra.mxu0 %v284
    %v417 = vpop.f32.mrf.mxu0
    %v418 = vadd.f32 %v105, %v417
    %v419 = vpop.f32.mrf.mxu0
    %v420 = vpop.f32.mrf.mxu0
    %v421 = vadd.f32 %v105, %v420
    %v422 = vpop.f32.mrf.mxu0
    %423 = vmatprep.mubr.bf16.mxu0 0
    %424 = vmatmul.mubr.bf16.gmra.mxu0 %v287
    %v425 = vpop.f32.mrf.mxu0
    %v426 = vadd.f32 %v105, %v425
    %v427 = vpop.f32.mrf.mxu0
    %v428 = vpop.f32.mrf.mxu0
    %v429 = vadd.f32 %v105, %v428
    %v430 = vpop.f32.mrf.mxu0
    %431 = vmatprep.mubr.bf16.mxu0 0
    %432 = vmatmul.mubr.bf16.gmra.mxu0 %v290
    %v433 = vpop.f32.mrf.mxu0
    %v434 = vadd.f32 %v105, %v433
    %v435 = vpop.f32.mrf.mxu0
    %v436 = vpop.f32.mrf.mxu0
    %v437 = vadd.f32 %v105, %v436
    %v438 = vpop.f32.mrf.mxu0
    %439 = vmatprep.mubr.bf16.mxu0 0
    %440 = vmatmul.mubr.bf16.gmra.mxu0 %v293
    %v441 = vpop.f32.mrf.mxu0
    %v442 = vadd.f32 %v105, %v441
    %v443 = vpop.f32.mrf.mxu0
    %v444 = vpop.f32.mrf.mxu0
    %v445 = vadd.f32 %v105, %v444
    %v446 = vpop.f32.mrf.mxu0
    %447 = vmatprep.mubr.bf16.mxu0 0
    %448 = vmatmul.mubr.bf16.gmra.mxu0 %v296
    %v449 = vpop.f32.mrf.mxu0
    %v450 = vadd.f32 %v105, %v449
    %v451 = vpop.f32.mrf.mxu0
    %v452 = vpop.f32.mrf.mxu0
    %v453 = vadd.f32 %v105, %v452
    %v454 = vpop.f32.mrf.mxu0
    %455 = vmatprep.mubr.bf16.mxu0 0
    %456 = vmatmul.mubr.bf16.gmra.mxu0 %v299
    %v457 = vpop.f32.mrf.mxu0
    %v458 = vadd.f32 %v105, %v457
    %v459 = vpop.f32.mrf.mxu0
    %v460 = vpop.f32.mrf.mxu0
    %v461 = vadd.f32 %v105, %v460
    %v462 = vpop.f32.mrf.mxu0
    %463 = vmatprep.mubr.bf16.mxu0 0
    %464 = vmatmul.mubr.bf16.gmra.mxu0 %v302
    %v465 = vpop.f32.mrf.mxu0
    %v466 = vadd.f32 %v105, %v465
    %v467 = vpop.f32.mrf.mxu0
    %v468 = vpop.f32.mrf.mxu0
    %v469 = vadd.f32 %v105, %v468
    %v470 = vpop.f32.mrf.mxu0
    %471 = vmatprep.mubr.bf16.mxu0 0
    %472 = vmatmul.mubr.bf16.gmra.mxu0 %v305
    %v473 = vpop.f32.mrf.mxu0
    %v474 = vadd.f32 %v105, %v473
    %v475 = vpop.f32.mrf.mxu0
    %v476 = vpop.f32.mrf.mxu0
    %v477 = vadd.f32 %v105, %v476
    %v478 = vpop.f32.mrf.mxu0
    %479 = vmatprep.mubr.bf16.mxu0 0
    %480 = vmatmul.mubr.bf16.gmra.mxu0 %v308
    %v481 = vpop.f32.mrf.mxu0
    %v482 = vadd.f32 %v105, %v481
    %v483 = vpop.f32.mrf.mxu0
    %v484 = vpop.f32.mrf.mxu0
    %v485 = vadd.f32 %v105, %v484
    %v486 = vpop.f32.mrf.mxu0
    %487 = vmatprep.mubr.bf16.mxu0 0
    %488 = vmatmul.mubr.bf16.gmra.mxu0 %v311
    %v489 = vpop.f32.mrf.mxu0
    %v490 = vadd.f32 %v105, %v489
    %v491 = vpop.f32.mrf.mxu0
    %v492 = vpop.f32.mrf.mxu0
    %v493 = vadd.f32 %v105, %v492
    %v494 = vpop.f32.mrf.mxu0
    %495 = vmatprep.mubr.bf16.mxu0 0
    %496 = vmatmul.mubr.bf16.gmra.mxu0 %v314
    %v497 = vpop.f32.mrf.mxu0
    %v498 = vadd.f32 %v105, %v497
    %v499 = vpop.f32.mrf.mxu0
    %v500 = vpop.f32.mrf.mxu0
    %v501 = vadd.f32 %v105, %v500
    %v502 = vpop.f32.mrf.mxu0
    %503 = vmatprep.mubr.bf16.mxu0 0
    %504 = vmatmul.mubr.bf16.gmra.mxu0 %v317
    %v505 = vpop.f32.mrf.mxu0
    %v506 = vadd.f32 %v105, %v505
    %v507 = vpop.f32.mrf.mxu0
    %v508 = vpop.f32.mrf.mxu0
    %v509 = vadd.f32 %v105, %v508
    %v510 = vpop.f32.mrf.mxu0
    %511 = vmatprep.mubr.bf16.mxu0 0
    %512 = vmatmul.mubr.bf16.gmra.mxu0 %v320
    %v513 = vpop.f32.mrf.mxu0
    %v514 = vadd.f32 %v105, %v513
    %v515 = vpop.f32.mrf.mxu0
    %v516 = vpop.f32.mrf.mxu0
    %v517 = vadd.f32 %v105, %v516
    %v518 = vpop.f32.mrf.mxu0
    %519 = vmatprep.mubr.bf16.mxu0 0
    %520 = vmatmul.mubr.bf16.gmra.mxu0 %v323
    %v521 = vpop.f32.mrf.mxu0
    %v522 = vadd.f32 %v105, %v521
    %v523 = vpop.f32.mrf.mxu0
    %v524 = vpop.f32.mrf.mxu0
    %v525 = vadd.f32 %v105, %v524
    %v526 = vpop.f32.mrf.mxu0
    %527 = vmatprep.mubr.bf16.mxu0 0
    %528 = vmatmul.mubr.bf16.gmra.mxu0 %v326
    %v529 = vpop.f32.mrf.mxu0
    %v530 = vadd.f32 %v105, %v529
    %v531 = vpop.f32.mrf.mxu0
    %v532 = vpop.f32.mrf.mxu0
    %v533 = vadd.f32 %v105, %v532
    %v534 = vpop.f32.mrf.mxu0
    %535 = vmatprep.mubr.bf16.mxu0 0
    %536 = vmatmul.mubr.bf16.gmra.mxu0 %v329
    %v537 = vpop.f32.mrf.mxu0
    %v538 = vadd.f32 %v105, %v537
    %v539 = vpop.f32.mrf.mxu0
    %v540 = vpop.f32.mrf.mxu0
    %v541 = vadd.f32 %v105, %v540
    %v542 = vpop.f32.mrf.mxu0
    %543 = vmatprep.mubr.bf16.mxu0 0
    %544 = vmatmul.mubr.bf16.gmra.mxu0 %v332
    %v545 = vpop.f32.mrf.mxu0
    %v546 = vadd.f32 %v105, %v545
    %v547 = vpop.f32.mrf.mxu0
    %v548 = vpop.f32.mrf.mxu0
    %v549 = vadd.f32 %v105, %v548
    %v550 = vpop.f32.mrf.mxu0
    %551 = vmatprep.mubr.bf16.mxu0 0
    %552 = vmatmul.mubr.bf16.gmra.mxu0 %v335
    %v553 = vpop.f32.mrf.mxu0
    %v554 = vadd.f32 %v105, %v553
    %v555 = vpop.f32.mrf.mxu0
    %v556 = vpop.f32.mrf.mxu0
    %v557 = vadd.f32 %v105, %v556
    %v558 = vpop.f32.mrf.mxu0
    %559 = vmatprep.mubr.bf16.mxu0 0
    %560 = vmatmul.mubr.bf16.gmra.mxu0 %v338
    %v561 = vpop.f32.mrf.mxu0
    %v562 = vadd.f32 %v105, %v561
    %v563 = vpop.f32.mrf.mxu0
    %v564 = vpop.f32.mrf.mxu0
    %v565 = vadd.f32 %v105, %v564
    %v566 = vpop.f32.mrf.mxu0
    %567 = vmatprep.mubr.bf16.mxu0 0
    %568 = vmatmul.mubr.bf16.gmra.mxu0 %v341
    %v569 = vpop.f32.mrf.mxu0
    %v570 = vadd.f32 %v105, %v569
    %v571 = vpop.f32.mrf.mxu0
    %v572 = vpop.f32.mrf.mxu0
    %v573 = vadd.f32 %v105, %v572
    %v574 = vpop.f32.mrf.mxu0
    %575 = vmatprep.mubr.bf16.mxu0 0
    %576 = vmatmul.mubr.bf16.gmra.mxu0 %v344
    %v577 = vpop.f32.mrf.mxu0
    %v578 = vadd.f32 %v105, %v577
    %v579 = vpop.f32.mrf.mxu0
    %v580 = vpop.f32.mrf.mxu0
    %v581 = vadd.f32 %v105, %v580
    %v582 = vpop.f32.mrf.mxu0
    %583 = vmatprep.mubr.bf16.mxu0 0
    %584 = vmatmul.mubr.bf16.gmra.mxu0 %v347
    %v585 = vpop.f32.mrf.mxu0
    %v586 = vadd.f32 %v105, %v585
    %v587 = vpop.f32.mrf.mxu0
    %v588 = vpop.f32.mrf.mxu0
    %v589 = vadd.f32 %v105, %v588
    %v590 = vpop.f32.mrf.mxu0
    %591 = vmatprep.mubr.bf16.mxu0 0
    %592 = vmatmul.mubr.bf16.gmra.mxu0 %v350
    %v593 = vpop.f32.mrf.mxu0
    %v594 = vadd.f32 %v105, %v593
    %v595 = vpop.f32.mrf.mxu0
    %v596 = vpop.f32.mrf.mxu0
    %v597 = vadd.f32 %v105, %v596
    %v598 = vpop.f32.mrf.mxu0
    %599 = vmatprep.mubr.bf16.mxu0 0
    %600 = vmatmul.mubr.bf16.gmra.mxu0 %v353
    %v601 = vpop.f32.mrf.mxu0
    %v602 = vadd.f32 %v105, %v601
    %v603 = vpop.f32.mrf.mxu0
    %v604 = vpop.f32.mrf.mxu0
    %v605 = vadd.f32 %v105, %v604
    %v606 = vpop.f32.mrf.mxu0
    %607 = vmatprep.mubr.bf16.mxu0 0
    %608 = vmatmul.mubr.bf16.gmra.mxu0 %v356
    %v609 = vpop.f32.mrf.mxu0
    %v610 = vadd.f32 %v105, %v609
    %v611 = vpop.f32.mrf.mxu0
    %v612 = vpop.f32.mrf.mxu0
    %v613 = vadd.f32 %v105, %v612
    %v614 = vpop.f32.mrf.mxu0
    %615 = vmatprep.mubr.bf16.mxu0 0
    %616 = vmatmul.mubr.bf16.gmra.mxu0 %v359
    %v617 = vpop.f32.mrf.mxu0
    %v618 = vadd.f32 %v105, %v617
    %v619 = vpop.f32.mrf.mxu0
    %v620 = vpop.f32.mrf.mxu0
    %v621 = vadd.f32 %v105, %v620
    %v622 = vpop.f32.mrf.mxu0
    %623 = vmatprep.mubr.bf16.mxu0 0
    %624 = vmatmul.mubr.bf16.gmra.mxu0 %v362
    %v625 = vpop.f32.mrf.mxu0
    %v626 = vadd.f32 %v105, %v625
    %v627 = vpop.f32.mrf.mxu0
    %v628 = vpop.f32.mrf.mxu0
    %v629 = vadd.f32 %v105, %v628
    %v630 = vpop.f32.mrf.mxu0
    %631 = vmatprep.mubr.bf16.mxu0 0
    %632 = vmatmul.mubr.bf16.gmra.mxu0 %v365
    %v633 = vpop.f32.mrf.mxu0
    %v634 = vadd.f32 %v105, %v633
    %v635 = vpop.f32.mrf.mxu0
    %v636 = vpop.f32.mrf.mxu0
    %v637 = vadd.f32 %v105, %v636
    %v638 = vpop.f32.mrf.mxu0
    %639 = vmatprep.mubr.bf16.mxu0 0
    %640 = vmatmul.mubr.bf16.gmra.mxu0 %v368
    %v641 = vpop.f32.mrf.mxu0
    %v642 = vadd.f32 %v105, %v641
    %v643 = vpop.f32.mrf.mxu0
    %v644 = vpop.f32.mrf.mxu0
    %v645 = vadd.f32 %v105, %v644
    %v646 = vpop.f32.mrf.mxu0
    %647 = vmatprep.mubr.bf16.mxu0 0
    %648 = vmatmul.mubr.bf16.gmra.mxu0 %v371
    %v649 = vpop.f32.mrf.mxu0
    %v650 = vadd.f32 %v105, %v649
    %v651 = vpop.f32.mrf.mxu0
    %v652 = vpop.f32.mrf.mxu0
    %v653 = vadd.f32 %v105, %v652
    %v654 = vpop.f32.mrf.mxu0
    %655 = vmatprep.mubr.bf16.mxu0 0
    %656 = vmatmul.mubr.bf16.gmra.mxu0 %v374
    %v657 = vpop.f32.mrf.mxu0
    %v658 = vadd.f32 %v105, %v657
    %v659 = vpop.f32.mrf.mxu0
    %v660 = vpop.f32.mrf.mxu0
    %v661 = vadd.f32 %v105, %v660
    %v662 = vpop.f32.mrf.mxu0
    %663 = vmatprep.mubr.bf16.mxu0 0
    %664 = vmatmul.mubr.bf16.gmra.mxu0 %v377
    %v665 = vpop.f32.mrf.mxu0
    %v666 = vadd.f32 %v105, %v665
    %v667 = vpop.f32.mrf.mxu0
    %v668 = vpop.f32.mrf.mxu0
    %v669 = vadd.f32 %v105, %v668
    %v670 = vpop.f32.mrf.mxu0
    %671 = vdwg.mxu0
    %v672 = vmax.f32 %v418, 0.0
    %v673 = vmax.f32 %v421, 0.0
    %v674 = vmax.f32 %v426, 0.0
    %v675 = vmax.f32 %v429, 0.0
    %v676 = vmax.f32 %v434, 0.0
    %v677 = vmax.f32 %v437, 0.0
    %v678 = vmax.f32 %v442, 0.0
    %v679 = vmax.f32 %v445, 0.0
    %v680 = vmax.f32 %v450, 0.0
    %v681 = vmax.f32 %v453, 0.0
    %v682 = vmax.f32 %v458, 0.0
    %v683 = vmax.f32 %v461, 0.0
    %v684 = vmax.f32 %v466, 0.0
    %v685 = vmax.f32 %v469, 0.0
    %v686 = vmax.f32 %v474, 0.0
    %v687 = vmax.f32 %v477, 0.0
    %v688 = vmax.f32 %v482, 0.0
    %v689 = vmax.f32 %v485, 0.0
    %v690 = vmax.f32 %v490, 0.0
    %v691 = vmax.f32 %v493, 0.0
    %v692 = vmax.f32 %v498, 0.0
    %v693 = vmax.f32 %v501, 0.0
    %v694 = vmax.f32 %v506, 0.0
    %v695 = vmax.f32 %v509, 0.0
    %v696 = vmax.f32 %v514, 0.0
    %v697 = vmax.f32 %v517, 0.0
    %v698 = vmax.f32 %v522, 0.0
    %v699 = vmax.f32 %v525, 0.0
    %v700 = vmax.f32 %v530, 0.0
    %v701 = vmax.f32 %v533, 0.0
    %v702 = vmax.f32 %v538, 0.0
    %v703 = vmax.f32 %v541, 0.0
    %v704 = vmax.f32 %v546, 0.0
    %v705 = vmax.f32 %v549, 0.0
    %v706 = vmax.f32 %v554, 0.0
    %v707 = vmax.f32 %v557, 0.0
    %v708 = vmax.f32 %v562, 0.0
    %v709 = vmax.f32 %v565, 0.0
    %v710 = vmax.f32 %v570, 0.0
    %v711 = vmax.f32 %v573, 0.0
    %v712 = vmax.f32 %v578, 0.0
    %v713 = vmax.f32 %v581, 0.0
    %v714 = vmax.f32 %v586, 0.0
    %v715 = vmax.f32 %v589, 0.0
    %v716 = vmax.f32 %v594, 0.0
    %v717 = vmax.f32 %v597, 0.0
    %v718 = vmax.f32 %v602, 0.0
    %v719 = vmax.f32 %v605, 0.0
    %v720 = vmax.f32 %v610, 0.0
    %v721 = vmax.f32 %v613, 0.0
    %v722 = vmax.f32 %v618, 0.0
    %v723 = vmax.f32 %v621, 0.0
    %v724 = vmax.f32 %v626, 0.0
    %v725 = vmax.f32 %v629, 0.0
    %v726 = vmax.f32 %v634, 0.0
    %v727 = vmax.f32 %v637, 0.0
    %v728 = vmax.f32 %v642, 0.0
    %v729 = vmax.f32 %v645, 0.0
    %v730 = vmax.f32 %v650, 0.0
    %v731 = vmax.f32 %v653, 0.0
    %v732 = vmax.f32 %v658, 0.0
    %v733 = vmax.f32 %v661, 0.0
    %v734 = vmax.f32 %v666, 0.0
    %v735 = vmax.f32 %v669, 0.0
    %v736 = vld [vmem:[%s3] sm:$0xf]
    %v737 = vpack.c.bf16 %v673, %v672
    %v738 = vpack.c.bf16 %v675, %v674
    %v739 = vpack.c.bf16 %v677, %v676
    %v740 = vpack.c.bf16 %v679, %v678
    %v741 = vpack.c.bf16 %v681, %v680
    %v742 = vpack.c.bf16 %v683, %v682
    %v743 = vpack.c.bf16 %v685, %v684
    %v744 = vpack.c.bf16 %v687, %v686
    %v745 = vpack.c.bf16 %v689, %v688
    %v746 = vpack.c.bf16 %v691, %v690
    %v747 = vpack.c.bf16 %v693, %v692
    %v748 = vpack.c.bf16 %v695, %v694
    %v749 = vpack.c.bf16 %v697, %v696
    %v750 = vpack.c.bf16 %v699, %v698
    %v751 = vpack.c.bf16 %v701, %v700
    %v752 = vpack.c.bf16 %v703, %v702
    %v753 = vpack.c.bf16 %v705, %v704
    %v754 = vpack.c.bf16 %v707, %v706
    %v755 = vpack.c.bf16 %v709, %v708
    %v756 = vpack.c.bf16 %v711, %v710
    %v757 = vpack.c.bf16 %v713, %v712
    %v758 = vpack.c.bf16 %v715, %v714
    %v759 = vpack.c.bf16 %v717, %v716
    %v760 = vpack.c.bf16 %v719, %v718
    %v761 = vpack.c.bf16 %v721, %v720
    %v762 = vpack.c.bf16 %v723, %v722
    %v763 = vpack.c.bf16 %v725, %v724
    %v764 = vpack.c.bf16 %v727, %v726
    %v765 = vpack.c.bf16 %v729, %v728
    %v766 = vpack.c.bf16 %v731, %v730
    %v767 = vpack.c.bf16 %v733, %v732
    %v768 = vpack.c.bf16 %v735, %v734
    %v771 = vunpack.c.l.s4 1966171168
    %v772 = vunpack.c.0.s8 %v771
    %v773 = vlaneseq
    %v774 = vshrl.u32 %v773, 7
    %v775 = vsub.s32 %v772, %v774
    %v776 = vrot.slane %v736, %v775
    %v777 = vcombine.high %v776, %v776
    %v779 = vunpack.c.l.s4 1966171168
    %v780 = vunpack.c.0.s8 %v779
    %v781 = vlaneseq
    %v782 = vshrl.u32 %v781, 7
    %v783 = vsub.s32 %v780, %v782
    %v784 = vrot.slane %v776, %v783
    %v786 = vunpack.c.l.s4 1966171168
    %v787 = vunpack.c.0.s8 %v786
    %v788 = vlaneseq
    %v789 = vshrl.u32 %v788, 7
    %v790 = vsub.s32 %v787, %v789
    %v791 = vrot.slane %v777, %v790
    %v792 = vcombine.high %v784, %v784
    %v793 = vcombine.high %v791, %v791
    %798 = vmatprep.subr.bf16.mxu0 0
    %799 = vmatpush1.bf16.msra.mxu0 %v744
    %800 = vmatprep.subr.bf16.mxu0 0
    %801 = vmatpush1.bf16.msra.mxu0 %v743
    %802 = vmatprep.subr.bf16.mxu0 0
    %803 = vmatpush1.bf16.msra.mxu0 %v742
    %804 = vmatprep.subr.bf16.mxu0 0
    %805 = vmatpush1.bf16.msra.mxu0 %v741
    %806 = vmatprep.subr.bf16.mxu0 0
    %807 = vmatpush1.bf16.msra.mxu0 %v740
    %808 = vmatprep.subr.bf16.mxu0 0
    %809 = vmatpush1.bf16.msra.mxu0 %v739
    %810 = vmatprep.subr.bf16.mxu0 0
    %811 = vmatpush1.bf16.msra.mxu0 %v738
    %812 = vmatprep.subr.bf16.mxu0 0
    %813 = vmatpush1.bf16.msra.mxu0 %v737
    %814 = vmatprep.subr.bf16.mxu0 0
    %815 = vmatpush2.bf16.msra.mxu0 %v752
    %816 = vmatprep.subr.bf16.mxu0 0
    %817 = vmatpush2.bf16.msra.mxu0 %v751
    %818 = vmatprep.subr.bf16.mxu0 0
    %819 = vmatpush2.bf16.msra.mxu0 %v750
    %820 = vmatprep.subr.bf16.mxu0 0
    %821 = vmatpush2.bf16.msra.mxu0 %v749
    %822 = vmatprep.subr.bf16.mxu0 0
    %823 = vmatpush2.bf16.msra.mxu0 %v748
    %824 = vmatprep.subr.bf16.mxu0 0
    %825 = vmatpush2.bf16.msra.mxu0 %v747
    %826 = vmatprep.subr.bf16.mxu0 0
    %827 = vmatpush2.bf16.msra.mxu0 %v746
    %828 = vmatprep.subr.bf16.mxu0 0
    %829 = vmatpush2.bf16.msra.mxu0 %v745
    %830 = vmatprep.mubr.bf16.mxu0 %v791
    %831 = vmatmul.mubr.bf16.gmra.mxu0 %v784
    %v832 = vpop.f32.mrf.mxu0
    %v833 = vadd.f32 0.0, %v832
    %v834 = vpop.f32.mrf.mxu0
    %v835 = vpop.f32.mrf.mxu0
    %v836 = vpop.f32.mrf.mxu0
    %837 = vdwg.mxu0
    %838 = vmatprep.subr.bf16.mxu0 0
    %839 = vmatpush1.bf16.msra.mxu0 %v760
    %840 = vmatprep.subr.bf16.mxu0 0
    %841 = vmatpush1.bf16.msra.mxu0 %v759
    %842 = vmatprep.subr.bf16.mxu0 0
    %843 = vmatpush1.bf16.msra.mxu0 %v758
    %844 = vmatprep.subr.bf16.mxu0 0
    %845 = vmatpush1.bf16.msra.mxu0 %v757
    %846 = vmatprep.subr.bf16.mxu0 0
    %847 = vmatpush1.bf16.msra.mxu0 %v756
    %848 = vmatprep.subr.bf16.mxu0 0
    %849 = vmatpush1.bf16.msra.mxu0 %v755
    %850 = vmatprep.subr.bf16.mxu0 0
    %851 = vmatpush1.bf16.msra.mxu0 %v754
    %852 = vmatprep.subr.bf16.mxu0 0
    %853 = vmatpush1.bf16.msra.mxu0 %v753
    %854 = vmatprep.subr.bf16.mxu0 0
    %855 = vmatpush2.bf16.msra.mxu0 %v768
    %856 = vmatprep.subr.bf16.mxu0 0
    %857 = vmatpush2.bf16.msra.mxu0 %v767
    %858 = vmatprep.subr.bf16.mxu0 0
    %859 = vmatpush2.bf16.msra.mxu0 %v766
    %860 = vmatprep.subr.bf16.mxu0 0
    %861 = vmatpush2.bf16.msra.mxu0 %v765
    %862 = vmatprep.subr.bf16.mxu0 0
    %863 = vmatpush2.bf16.msra.mxu0 %v764
    %864 = vmatprep.subr.bf16.mxu0 0
    %865 = vmatpush2.bf16.msra.mxu0 %v763
    %866 = vmatprep.subr.bf16.mxu0 0
    %867 = vmatpush2.bf16.msra.mxu0 %v762
    %868 = vmatprep.subr.bf16.mxu0 0
    %869 = vmatpush2.bf16.msra.mxu0 %v761
    %870 = vmatprep.mubr.bf16.mxu0 %v793
    %871 = vmatmul.mubr.bf16.gmra.mxu0 %v792
    %v872 = vpop.f32.mrf.mxu0
    %v873 = vadd.f32 %v833, %v872
    %v874 = vpop.f32.mrf.mxu0
    %v875 = vpop.f32.mrf.mxu0
    %v876 = vpop.f32.mrf.mxu0
    %877 = vdwg.mxu0
    %v878 = vpack.c.bf16 %v873, %v873
    %v879 = vld [vmem:[%s4] sm:$0xf]
    %v880 = vld [vmem:[%s4 + $0x4] sm:$0xf]
    %v881 = vld [vmem:[%s4 + $0x8] sm:$0xf]
    %v882 = vld [vmem:[%s4 + $0xc] sm:$0xf]
    %v883 = vld [vmem:[%s5] sm:$0x1]
    %v885 = vlaneseq
    %v886 = vshrl.u32 %v885, 7
    %v887 = vsub.s32 0, %v886
    %v888 = vrot.slane %v883, %v887
    %v894 = vunpack.c.l.b16 %v879
    %v895 = vunpack.c.l.b16 %v880
    %v896 = vunpack.c.l.b16 %v881
    %v897 = vunpack.c.l.b16 %v882
    %v898 = vpack.c.b16 %v895, %v894
    %v899 = vpack.c.b16 %v897, %v896
    %vm902 = vcmask 261120
    %v904 = vsel %vm902, %v878, 0
    %906 = vmatprep.subr.bf16.mxu0 0
    %907 = vmatpush1.bf16.msra.mxu0 0
    %908 = vmatprep.subr.bf16.mxu0 0
    %909 = vmatpush1.bf16.msra.mxu0 0
    %910 = vmatprep.subr.bf16.mxu0 0
    %911 = vmatpush1.bf16.msra.mxu0 0
    %912 = vmatprep.subr.bf16.mxu0 0
    %913 = vmatpush1.bf16.msra.mxu0 0
    %914 = vmatprep.subr.bf16.mxu0 0
    %915 = vmatpush1.bf16.msra.mxu0 0
    %916 = vmatprep.subr.bf16.mxu0 0
    %917 = vmatpush1.bf16.msra.mxu0 0
    %918 = vmatprep.subr.bf16.mxu0 0
    %919 = vmatpush1.bf16.msra.mxu0 %v899
    %920 = vmatprep.subr.bf16.mxu0 0
    %921 = vmatpush1.bf16.msra.mxu0 %v898
    %922 = vmatprep.subr.bf16.mxu0 0
    %923 = vmatpush2.bf16.msra.mxu0 0
    %924 = vmatprep.subr.bf16.mxu0 0
    %925 = vmatpush2.bf16.msra.mxu0 0
    %926 = vmatprep.subr.bf16.mxu0 0
    %927 = vmatpush2.bf16.msra.mxu0 0
    %928 = vmatprep.subr.bf16.mxu0 0
    %929 = vmatpush2.bf16.msra.mxu0 0
    %930 = vmatprep.subr.bf16.mxu0 0
    %931 = vmatpush2.bf16.msra.mxu0 0
    %932 = vmatprep.subr.bf16.mxu0 0
    %933 = vmatpush2.bf16.msra.mxu0 0
    %934 = vmatprep.subr.bf16.mxu0 0
    %935 = vmatpush2.bf16.msra.mxu0 0
    %936 = vmatprep.subr.bf16.mxu0 0
    %937 = vmatpush2.bf16.msra.mxu0 0
    %938 = vmatprep.mubr.bf16.mxu0 0
    %939 = vmatmul.mubr.bf16.gmra.mxu0 %v904
    %v940 = vpop.f32.mrf.mxu0
    %v941 = vadd.f32 %v888, %v940
    %v942 = vpop.f32.mrf.mxu0
    %v943 = vpop.f32.mrf.mxu0
    %v944 = vpop.f32.mrf.mxu0
    %945 = vdwg.mxu0
    %vm946 = vcmp.ge.f32.partialorder %v941, 0.0
    %v947 = vmul.f32 %v941, 0.01
    %v948 = vsel %vm946, %v941, %v947
    %v949 = vpack.c.bf16 %v948, %v948
    %v950 = vld [vmem:[%s6] sm:$0xf]
    %v951 = vld [vmem:[%s6 + $0x4] sm:$0xf]
    %v952 = vld [vmem:[%s6 + $0x8] sm:$0xf]
    %v953 = vld [vmem:[%s6 + $0xc] sm:$0xf]
    %v954 = vld [vmem:[%s7] sm:$0x1]
    %v956 = vlaneseq
    %v957 = vshrl.u32 %v956, 7
    %v958 = vsub.s32 0, %v957
    %v959 = vrot.slane %v954, %v958
    %v965 = vunpack.c.l.b16 %v950
    %v966 = vunpack.c.l.b16 %v951
    %v967 = vunpack.c.l.b16 %v952
    %v968 = vunpack.c.l.b16 %v953
    %v969 = vpack.c.b16 %v966, %v965
    %v970 = vpack.c.b16 %v968, %v967
    %v974 = vsel %vm902, %v949, 0
    %976 = vmatprep.subr.bf16.mxu0 0
    %977 = vmatpush1.bf16.msra.mxu0 0
    %978 = vmatprep.subr.bf16.mxu0 0
    %979 = vmatpush1.bf16.msra.mxu0 0
    %980 = vmatprep.subr.bf16.mxu0 0
    %981 = vmatpush1.bf16.msra.mxu0 0
    %982 = vmatprep.subr.bf16.mxu0 0
    %983 = vmatpush1.bf16.msra.mxu0 0
    %984 = vmatprep.subr.bf16.mxu0 0
    %985 = vmatpush1.bf16.msra.mxu0 0
    %986 = vmatprep.subr.bf16.mxu0 0
    %987 = vmatpush1.bf16.msra.mxu0 0
    %988 = vmatprep.subr.bf16.mxu0 0
    %989 = vmatpush1.bf16.msra.mxu0 %v970
    %990 = vmatprep.subr.bf16.mxu0 0
    %991 = vmatpush1.bf16.msra.mxu0 %v969
    %992 = vmatprep.subr.bf16.mxu0 0
    %993 = vmatpush2.bf16.msra.mxu0 0
    %994 = vmatprep.subr.bf16.mxu0 0
    %995 = vmatpush2.bf16.msra.mxu0 0
    %996 = vmatprep.subr.bf16.mxu0 0
    %997 = vmatpush2.bf16.msra.mxu0 0
    %998 = vmatprep.subr.bf16.mxu0 0
    %999 = vmatpush2.bf16.msra.mxu0 0
    %1000 = vmatprep.subr.bf16.mxu0 0
    %1001 = vmatpush2.bf16.msra.mxu0 0
    %1002 = vmatprep.subr.bf16.mxu0 0
    %1003 = vmatpush2.bf16.msra.mxu0 0
    %1004 = vmatprep.subr.bf16.mxu0 0
    %1005 = vmatpush2.bf16.msra.mxu0 0
    %1006 = vmatprep.subr.bf16.mxu0 0
    %1007 = vmatpush2.bf16.msra.mxu0 0
    %1008 = vmatprep.mubr.bf16.mxu0 0
    %1009 = vmatmul.mubr.bf16.gmra.mxu0 %v974
    %v1010 = vpop.f32.mrf.mxu0
    %v1011 = vadd.f32 %v959, %v1010
    %v1012 = vpop.f32.mrf.mxu0
    %v1013 = vpop.f32.mrf.mxu0
    %v1014 = vpop.f32.mrf.mxu0
    %1015 = vdwg.mxu0
    %vm1016 = vcmask 263168
    %1017 = vst.msk [vmem:[#allocation2] sm:$0x3] %vm1016, %v1011
    // Predicated region
    $region34: #{tpu_custom_call.1} parent=1 // pred_check
      _
    $region35: #{tpu_custom_call.1} parent=1 // pred_check_branch
      %1019 = sbr.rel (0) target = $region37
    $region36: #{tpu_custom_call.1} parent=1 // pred_region
      %s1021 = ssub.s32 32, 32
      %1022 = vsyncadd [#allocation3], %s1021
      %s1024 = sshll.u32 [#allocation2], 4
      %s1025 = int_to_ptr.vmem [resolvable:$true] %s1024
      %1027 = dma.vmem_to_hbm [thread:$0]  %s1025, 32, %s8, [#allocation3]
    $region37: #{tpu_custom_call.1} parent=1 // pred_fallthru
      _
    // Predicated region
    $region38: #{tpu_custom_call.1} parent=1 // pred_check
      _
    $region39: #{tpu_custom_call.1} parent=1 // pred_check_branch
      %1029 = sbr.rel (0) target = $region41
    $region40: #{tpu_custom_call.1} parent=1 // pred_region
      %1030 = dma.done [#allocation3], 32
    $region41: #{tpu_custom_call.1} parent=1 // pred_fallthru
      _
    %1031 = vsyncpa [#allocation3], 1

</llo_original>
